<compile_context>
chip_gen: v6e
topology: v6e:2x2x1
jax: 0.10.0
libtpu: 0.0.40
codegen_flags: <defaults>
</compile_context>

<pallas_src>
import jax
import jax.numpy as jnp
from jax.experimental import pallas as pl
from jax.experimental.pallas import tpu as pltpu

IGNORE_INDEX = -100

_MAX_VOCAB_TILE = 8192


def _cdiv(a, b):
    return -(-a // b)


def _round_up(a, b):
    return _cdiv(a, b) * b


def _vmem_capacity_bytes():
    """Physical VMEM per TensorCore; conservative 64 MiB fallback (v7x-safe)."""
    try:
        info = pltpu.get_tpu_info()
        cap = getattr(info, "vmem_capacity_bytes", None)
        if cap:
            return int(cap)
    except Exception:
        pass
    return 64 * 1024 * 1024


def _choose_tiles(n, v, logit_itemsize):
    """Pick (row_tile, vocab_tile, vmem_limit) for an (n, v) logits matrix."""
    vk = v if v <= _MAX_VOCAB_TILE else _MAX_VOCAB_TILE

    vmem_cap = _vmem_capacity_bytes()
    if vmem_cap <= 96 * 1024 * 1024:
        # v7x-class: 64 MiB VMEM per TensorCore.
        slab_budget = 36 * 1024 * 1024
        max_tr = 256
        vmem_limit = 44 * 1024 * 1024
    else:
        # v5e / v6e: 128 MiB VMEM.
        slab_budget = 72 * 1024 * 1024
        max_tr = 512
        vmem_limit = 96 * 1024 * 1024

    # Per-row bytes of the streaming working set:
    #   2 x double-buffered logits block  +  ~2 materialized f32 temps (x, p).
    per_row = vk * (2 * logit_itemsize + 2 * 4)
    tr = slab_budget // max(per_row, 1)
    tr = max(16, min(max_tr, (tr // 16) * 16))     # multiple of 16: f32 & bf16 ok
    tr = min(tr, max(16, _round_up(n, 16)))        # don't exceed token count
    if n >= 32:
        # Keep >= 2 row tiles so v7x's two TensorCores both get work.
        tr = min(tr, max(16, _round_up(_cdiv(n, 2), 16)))
    return tr, vk, vmem_limit


def _make_ce_kernel(*, n_rows, v, vk, tr, ignore_index, per_token):
    """Online-logsumexp cross-entropy kernel body."""
    nk = _cdiv(v, vk)
    mask_vocab = (v % vk) != 0             # last vocab chunk is ragged

    def kernel(labels_ref, logits_ref, out_ref, m_ref, l_ref, t_ref):
        i = pl.program_id(0)               # row-tile index (parallel)
        k = pl.program_id(1)               # vocab-chunk index (reduction)

        @pl.when(k == 0)
        def _init():
            m_ref[...] = jnp.full(m_ref.shape, -jnp.inf, jnp.float32)
            l_ref[...] = jnp.zeros(l_ref.shape, jnp.float32)
            t_ref[...] = jnp.zeros(t_ref.shape, jnp.float32)

        lbl = labels_ref[...]              # (TR, 1) int32
        lbl_local = lbl - k * vk           # target's local lane id in this chunk

        def update(apply_vocab_mask):
            x = logits_ref[...].astype(jnp.float32)              # (TR, VK)
            lane_local = jax.lax.broadcasted_iota(jnp.int32, x.shape, 1)
            if apply_vocab_mask:
                # Ragged last chunk: lanes beyond V -> -inf so boundary-block
                # garbage never enters max / exp.
                x = jnp.where(lane_local < (v - k * vk), x, -jnp.inf)

            # --- online logsumexp update --------------------------------
            m_prev = m_ref[...]
            m_new = jnp.maximum(m_prev, jnp.max(x, axis=-1, keepdims=True))
            alpha = jnp.exp(m_prev - m_new)        # 0 at k==0 (m_prev=-inf)
            p = jnp.exp(x - m_new)
            l_ref[...] = alpha * l_ref[...] + jnp.sum(p, axis=-1, keepdims=True)
            # Target-logit gather: select then lane-reduce (no bool->f32 mul).
            t_ref[...] = t_ref[...] + jnp.sum(
                jnp.where(lane_local == lbl_local, x, 0.0),
                axis=-1, keepdims=True)
            m_ref[...] = m_new

        if mask_vocab and nk > 1:
            # Only the last chunk pays the masking compare+select.
            @pl.when(k < nk - 1)
            def _unmasked():
                update(False)

            @pl.when(k == nk - 1)
            def _masked():
                update(True)
        else:
            update(mask_vocab)

        # --- finalize on the last vocab chunk ---------------------------
        @pl.when(k == nk - 1)
        def _finalize():
            lse = m_ref[...] + jnp.log(l_ref[...])                # (TR, 1)
            row = i * tr + jax.lax.broadcasted_iota(jnp.int32, lbl.shape, 0)
            valid = (lbl != ignore_index) & (row < n_rows)
            # select (not multiply): inf/nan from masked/garbage rows never
            # leaks into the sums.
            loss_rows = jnp.where(valid, lse - t_ref[...], 0.0)   # (TR, 1)

            if per_token:
                out_ref[...] = loss_rows
            else:
                loss_sum = jnp.sum(loss_rows, axis=0, keepdims=True)          # (1,1)
                valid_sum = jnp.sum(valid.astype(jnp.float32), axis=0,
                                    keepdims=True)                             # (1,1)
                sub = jax.lax.broadcasted_iota(jnp.int32, out_ref.shape, 1)
                ls = jnp.broadcast_to(loss_sum.reshape(1, 1, 1), out_ref.shape)
                vs = jnp.broadcast_to(valid_sum.reshape(1, 1, 1), out_ref.shape)
                # sublane 0 = loss partial sum, sublane 1 = valid count.
                out_ref[...] = jnp.where(sub == 0, ls,
                                         jnp.where(sub == 1, vs, 0.0))

    return kernel, nk


def _ce_pallas(logits_2d, labels_2d, *, tr, vk, vmem_limit, ignore_index,
               per_token):
    n, v = logits_2d.shape
    kernel, nk = _make_ce_kernel(n_rows=n, v=v, vk=vk, tr=tr,
                                 ignore_index=ignore_index, per_token=per_token)
    num_row_tiles = _cdiv(n, tr)
    grid = (num_row_tiles, nk)

    if per_token:
        # Writeback is tr*4 bytes once per row tile -- negligible next to the
        # logits stream, so keep the simple (N, 1) column layout.
        out_shape = jax.ShapeDtypeStruct((n, 1), jnp.float32)
        out_spec = pl.BlockSpec((tr, 1), lambda i, k: (i, 0))
    else:
        # Lane-dense partial-sum slab: one (8, 128) block per row tile.
        out_shape = jax.ShapeDtypeStruct((num_row_tiles, 8, 128), jnp.float32)
        out_spec = pl.BlockSpec((1, 8, 128), lambda i, k: (i, 0, 0))

    return pl.pallas_call(
        kernel,
        out_shape=out_shape,
        grid_spec=pltpu.PrefetchScalarGridSpec(
            num_scalar_prefetch=0,
            grid=grid,
            in_specs=[
                # labels: k-invariant index_map -> fetched once per row tile.
                pl.BlockSpec((tr, 1), lambda i, k: (i, 0)),
                # streaming logits chunk.
                pl.BlockSpec((tr, vk), lambda i, k: (i, k)),
            ],
            out_specs=out_spec,
            scratch_shapes=[
                pltpu.VMEM((tr, 1), jnp.float32),   # running max  m
                pltpu.VMEM((tr, 1), jnp.float32),   # running sum  l
                pltpu.VMEM((tr, 1), jnp.float32),   # target-logit accumulator
            ],
        ),
        compiler_params=pltpu.CompilerParams(
            # Row axis sharded across v7x's two TensorCores; vocab axis is the
            # sequential online-logsumexp reduction.
            dimension_semantics=("parallel", "arbitrary"),
            vmem_limit_bytes=int(vmem_limit),
        ),
    )(labels_2d, logits_2d)


def intern_loss(logits, labels, *, reduction="mean", ignore_index=IGNORE_INDEX,
                row_tile=None, vocab_tile=None):
    """Equivalent of InternLoss.forward(logits, labels).

    logits: (..., V) float (bf16 preferred: the kernel is HBM-bound and
            upcasts to f32 internally); labels: (...) int with -100 == ignore.
    """
    assert reduction in ("mean", "none")
    v = logits.shape[-1]
    logits_2d = logits.reshape(-1, v)                    # keep caller dtype
    labels_2d = labels.reshape(-1, 1).astype(jnp.int32)
    n = logits_2d.shape[0]

    tr, vk, vmem_limit = _choose_tiles(n, v, jnp.dtype(logits_2d.dtype).itemsize)
    if row_tile is not None:
        tr = row_tile
    if vocab_tile is not None:
        vk = vocab_tile

    if reduction == "none":
        per_tok = _ce_pallas(logits_2d, labels_2d, tr=tr, vk=vk,
                             vmem_limit=vmem_limit,
                             ignore_index=ignore_index, per_token=True)
        return per_tok.reshape(-1)

    partials = _ce_pallas(logits_2d, labels_2d, tr=tr, vk=vk,
                          vmem_limit=vmem_limit,
                          ignore_index=ignore_index, per_token=False)
    loss_sum = partials[:, 0, 0].sum()
    valid_sum = partials[:, 1, 0].sum()
    # NOTE: guards the degenerate all-ignored case (PyTorch would return NaN).
    return loss_sum / jnp.maximum(valid_sum, 1.0)


# ----------------------------- reference -----------------------------------
def _reference_per_token(logits, labels, ignore_index=IGNORE_INDEX):
    v = logits.shape[-1]
    x = logits.reshape(-1, v).astype(jnp.float32)
    lbl = labels.reshape(-1).astype(jnp.int32)
    lse = jax.scipy.special.logsumexp(x, axis=-1)
    safe = jnp.where(lbl == ignore_index, 0, lbl)
    tgt = jnp.take_along_axis(x, safe[:, None], axis=-1)[:, 0]
    return jnp.where(lbl == ignore_index, 0.0, lse - tgt)


def _reference_mean(logits, labels, ignore_index=IGNORE_INDEX):
    per = _reference_per_token(logits, labels, ignore_index)
    cond = labels.reshape(-1) != ignore_index
    return per.sum() / jnp.maximum(cond.sum(), 1).astype(jnp.float32)


# ------------------------------- demo ---------------------------------------
if __name__ == "__main__":
    key = jax.random.PRNGKey(0)

    # Case 1: bf16 logits (half the HBM traffic), single vocab chunk,
    #         both 'mean' and 'none' reductions.
    batch, seq, vocab = 2, 8, 2048
    k1, k2, k3, key = jax.random.split(key, 4)
    logits = jax.random.normal(k1, (batch, seq, vocab),
                               dtype=jnp.float32).astype(jnp.bfloat16)
    labels = jax.random.randint(k2, (batch, seq), 0, vocab, dtype=jnp.int32)
    labels = jnp.where(jax.random.bernoulli(k3, 0.25, (batch, seq)),
                       IGNORE_INDEX, labels)

    loss = jax.block_until_ready(intern_loss(logits, labels, reduction="mean"))
    ref = _reference_mean(logits, labels)
    assert jnp.allclose(loss, ref, rtol=2e-4, atol=2e-4), (loss, ref)

    per_tok = jax.block_until_ready(intern_loss(logits, labels, reduction="none"))
    ref_tok = _reference_per_token(logits, labels)
    assert jnp.allclose(per_tok, ref_tok, rtol=2e-4, atol=2e-4)

    # Case 2: f32 logits, forced vocab chunking with a ragged last chunk
    #         (V=640, vocab_tile=256 -> 3 chunks, last one ragged) and a
    #         ragged row tile (N=14 < 16), exercising the masked/unmasked
    #         pl.when split and the online-logsumexp path.
    batch2, seq2, vocab2 = 2, 7, 640
    k4, k5, k6, key = jax.random.split(key, 4)
    logits2 = jax.random.normal(k4, (batch2, seq2, vocab2), dtype=jnp.float32)
    labels2 = jax.random.randint(k5, (batch2, seq2), 0, vocab2, dtype=jnp.int32)
    labels2 = jnp.where(jax.random.bernoulli(k6, 0.25, (batch2, seq2)),
                        IGNORE_INDEX, labels2)

    loss2 = jax.block_until_ready(
        intern_loss(logits2, labels2, reduction="mean", vocab_tile=256))
    ref2 = _reference_mean(logits2, labels2)
    assert jnp.allclose(loss2, ref2, rtol=1e-5, atol=1e-5), (loss2, ref2)

    per_tok2 = jax.block_until_ready(
        intern_loss(logits2, labels2, reduction="none", vocab_tile=256))
    ref_tok2 = _reference_per_token(logits2, labels2)
    assert jnp.allclose(per_tok2, ref_tok2, rtol=1e-5, atol=1e-5)

    print("KERNEL_OK")
</pallas_src>

<mosaic_0001>
module attributes {stable_mosaic.version = 11 : i64} {
  func.func @kernel(%arg0: i32, %arg1: i32, %arg2: memref<16x1xi32, #tpu.memory_space<vmem>>, %arg3: memref<16x2048xbf16, #tpu.memory_space<vmem>>, %arg4: memref<1x8x128xf32, #tpu.memory_space<vmem>>, %arg5: memref<16x1xf32, #tpu.memory_space<vmem>>, %arg6: memref<16x1xf32, #tpu.memory_space<vmem>>, %arg7: memref<16x1xf32, #tpu.memory_space<vmem>>) attributes {dimension_semantics = [#tpu.dimension_semantics<parallel>, #tpu.dimension_semantics<arbitrary>], iteration_bounds = array<i64: 1, 1>, scalar_prefetch = 0 : i64, scratch_operands = 3 : i64, tpu.core_type = #tpu.core_type<tc>, window_params = [{transform_indices = @transform_0, window_bounds = array<i64: 16, 1>}, {transform_indices = @transform_1, window_bounds = array<i64: 16, 2048>}, {transform_indices = @transform_2, window_bounds = array<i64: 1, 8, 128>}]} {
    %c0_i32 = arith.constant 0 : i32
    %0 = arith.cmpi eq, %arg1, %c0_i32 : i32
    %1 = arith.extui %0 : i1 to i32
    %c0_i32_0 = arith.constant 0 : i32
    %2 = arith.cmpi ne, %1, %c0_i32_0 : i32
    scf.if %2 {
      %cst_21 = arith.constant 0xFF800000 : f32
      %38 = vector.broadcast %cst_21 : f32 to vector<16x1xf32>
      %c0_22 = arith.constant 0 : index
      %c0_23 = arith.constant 0 : index
      %39 = vector.load %arg5[%c0_22, %c0_23] : memref<16x1xf32, #tpu.memory_space<vmem>>, vector<16x1xf32>
      tpu.vector_store %arg5[%c0_22, %c0_23], %38 {strides = array<i32>} : memref<16x1xf32, #tpu.memory_space<vmem>>, vector<16x1xf32>,
      %cst_24 = arith.constant 0.000000e+00 : f32
      %40 = vector.broadcast %cst_24 : f32 to vector<16x1xf32>
      %c0_25 = arith.constant 0 : index
      %c0_26 = arith.constant 0 : index
      %41 = vector.load %arg6[%c0_25, %c0_26] : memref<16x1xf32, #tpu.memory_space<vmem>>, vector<16x1xf32>
      tpu.vector_store %arg6[%c0_25, %c0_26], %40 {strides = array<i32>} : memref<16x1xf32, #tpu.memory_space<vmem>>, vector<16x1xf32>,
      %cst_27 = arith.constant 0.000000e+00 : f32
      %42 = vector.broadcast %cst_27 : f32 to vector<16x1xf32>
      %c0_28 = arith.constant 0 : index
      %c0_29 = arith.constant 0 : index
      %43 = vector.load %arg7[%c0_28, %c0_29] : memref<16x1xf32, #tpu.memory_space<vmem>>, vector<16x1xf32>
      tpu.vector_store %arg7[%c0_28, %c0_29], %42 {strides = array<i32>} : memref<16x1xf32, #tpu.memory_space<vmem>>, vector<16x1xf32>,
    } else {
    }
    %c0 = arith.constant 0 : index
    %c0_1 = arith.constant 0 : index
    %3 = vector.load %arg2[%c0, %c0_1] : memref<16x1xi32, #tpu.memory_space<vmem>>, vector<16x1xi32>
    %c2048_i32 = arith.constant 2048 : i32
    %4 = arith.muli %arg1, %c2048_i32 : i32
    %5 = vector.broadcast %4 : i32 to vector<16x1xi32>
    %6 = arith.subi %3, %5 : vector<16x1xi32>
    %c0_2 = arith.constant 0 : index
    %c0_3 = arith.constant 0 : index
    %7 = vector.load %arg3[%c0_2, %c0_3] : memref<16x2048xbf16, #tpu.memory_space<vmem>>, vector<16x2048xbf16>
    %8 = arith.extf %7 : vector<16x2048xbf16> to vector<16x2048xf32>
    %9 = tpu.iota {dimensions = array<i32: 1>} : vector<16x2048xi32>
    %c0_4 = arith.constant 0 : index
    %c0_5 = arith.constant 0 : index
    %10 = vector.load %arg5[%c0_4, %c0_5] : memref<16x1xf32, #tpu.memory_space<vmem>>, vector<16x1xf32>
    %cst = arith.constant dense<0xFF800000> : vector<16xf32>
    %11 = vector.multi_reduction <maximumf>, %8, %cst [1] : vector<16x2048xf32> to vector<16xf32>
    %12 = vector.shape_cast %11 : vector<16xf32> to vector<16x1xf32>
    %13 = arith.maximumf %10, %12 : vector<16x1xf32>
    %14 = arith.subf %10, %13 : vector<16x1xf32>
    %15 = math.exp %14 : vector<16x1xf32>
    %16 = vector.broadcast %13 : vector<16x1xf32> to vector<16x2048xf32>
    %17 = arith.subf %8, %16 : vector<16x2048xf32>
    %18 = math.exp %17 : vector<16x2048xf32>
    %c0_6 = arith.constant 0 : index
    %c0_7 = arith.constant 0 : index
    %19 = vector.load %arg6[%c0_6, %c0_7] : memref<16x1xf32, #tpu.memory_space<vmem>>, vector<16x1xf32>
    %20 = arith.mulf %15, %19 : vector<16x1xf32>
    %cst_8 = arith.constant dense<0.000000e+00> : vector<16xf32>
    %21 = vector.multi_reduction <add>, %18, %cst_8 [1] : vector<16x2048xf32> to vector<16xf32>
    %22 = vector.shape_cast %21 : vector<16xf32> to vector<16x1xf32>
    %23 = arith.addf %20, %22 : vector<16x1xf32>
    %c0_9 = arith.constant 0 : index
    %c0_10 = arith.constant 0 : index
    %24 = vector.load %arg6[%c0_9, %c0_10] : memref<16x1xf32, #tpu.memory_space<vmem>>, vector<16x1xf32>
    tpu.vector_store %arg6[%c0_9, %c0_10], %23 {strides = array<i32>} : memref<16x1xf32, #tpu.memory_space<vmem>>, vector<16x1xf32>,
    %c0_11 = arith.constant 0 : index
    %c0_12 = arith.constant 0 : index
    %25 = vector.load %arg7[%c0_11, %c0_12] : memref<16x1xf32, #tpu.memory_space<vmem>>, vector<16x1xf32>
    %26 = vector.broadcast %6 : vector<16x1xi32> to vector<16x2048xi32>
    %27 = arith.cmpi eq, %9, %26 : vector<16x2048xi32>
    %cst_13 = arith.constant 0.000000e+00 : f32
    %28 = vector.broadcast %cst_13 : f32 to vector<16x2048xf32>
    %29 = arith.select %27, %8, %28 : vector<16x2048xi1>, vector<16x2048xf32>
    %cst_14 = arith.constant dense<0.000000e+00> : vector<16xf32>
    %30 = vector.multi_reduction <add>, %29, %cst_14 [1] : vector<16x2048xf32> to vector<16xf32>
    %31 = vector.shape_cast %30 : vector<16xf32> to vector<16x1xf32>
    %32 = arith.addf %25, %31 : vector<16x1xf32>
    %c0_15 = arith.constant 0 : index
    %c0_16 = arith.constant 0 : index
    %33 = vector.load %arg7[%c0_15, %c0_16] : memref<16x1xf32, #tpu.memory_space<vmem>>, vector<16x1xf32>
    tpu.vector_store %arg7[%c0_15, %c0_16], %32 {strides = array<i32>} : memref<16x1xf32, #tpu.memory_space<vmem>>, vector<16x1xf32>,
    %c0_17 = arith.constant 0 : index
    %c0_18 = arith.constant 0 : index
    %34 = vector.load %arg5[%c0_17, %c0_18] : memref<16x1xf32, #tpu.memory_space<vmem>>, vector<16x1xf32>
    tpu.vector_store %arg5[%c0_17, %c0_18], %13 {strides = array<i32>} : memref<16x1xf32, #tpu.memory_space<vmem>>, vector<16x1xf32>,
    %c0_i32_19 = arith.constant 0 : i32
    %35 = arith.cmpi eq, %arg1, %c0_i32_19 : i32
    %36 = arith.extui %35 : i1 to i32
    %c0_i32_20 = arith.constant 0 : i32
    %37 = arith.cmpi ne, %36, %c0_i32_20 : i32
    scf.if %37 {
      %c0_21 = arith.constant 0 : index
      %c0_22 = arith.constant 0 : index
      %38 = vector.load %arg5[%c0_21, %c0_22] : memref<16x1xf32, #tpu.memory_space<vmem>>, vector<16x1xf32>
      %c0_23 = arith.constant 0 : index
      %c0_24 = arith.constant 0 : index
      %39 = vector.load %arg6[%c0_23, %c0_24] : memref<16x1xf32, #tpu.memory_space<vmem>>, vector<16x1xf32>
      %40 = math.log %39 : vector<16x1xf32>
      %41 = arith.addf %38, %40 : vector<16x1xf32>
      %c16_i32 = arith.constant 16 : i32
      %42 = arith.muli %arg0, %c16_i32 : i32
      %43 = tpu.iota {dimensions = array<i32: 0>} : vector<16x1xi32>
      %44 = vector.broadcast %42 : i32 to vector<16x1xi32>
      %45 = arith.addi %44, %43 : vector<16x1xi32>
      %c-100_i32 = arith.constant -100 : i32
      %46 = vector.broadcast %c-100_i32 : i32 to vector<16x1xi32>
      %47 = arith.cmpi ne, %3, %46 : vector<16x1xi32>
      %c16_i32_25 = arith.constant 16 : i32
      %48 = vector.broadcast %c16_i32_25 : i32 to vector<16x1xi32>
      %49 = arith.cmpi slt, %45, %48 : vector<16x1xi32>
      %50 = arith.andi %47, %49 : vector<16x1xi1>
      %c0_26 = arith.constant 0 : index
      %c0_27 = arith.constant 0 : index
      %51 = vector.load %arg7[%c0_26, %c0_27] : memref<16x1xf32, #tpu.memory_space<vmem>>, vector<16x1xf32>
      %52 = arith.subf %41, %51 : vector<16x1xf32>
      %cst_28 = arith.constant 0.000000e+00 : f32
      %53 = vector.broadcast %cst_28 : f32 to vector<16x1xf32>
      %54 = arith.select %50, %52, %53 : vector<16x1xi1>, vector<16x1xf32>
      %cst_29 = arith.constant dense<0.000000e+00> : vector<1xf32>
      %55 = vector.multi_reduction <add>, %54, %cst_29 [0] : vector<16x1xf32> to vector<1xf32>
      %56 = vector.shape_cast %55 : vector<1xf32> to vector<1x1xf32>
      %57 = arith.extui %50 : vector<16x1xi1> to vector<16x1xi32>
      %58 = arith.sitofp %57 : vector<16x1xi32> to vector<16x1xf32>
      %cst_30 = arith.constant dense<0.000000e+00> : vector<1xf32>
      %59 = vector.multi_reduction <add>, %58, %cst_30 [0] : vector<16x1xf32> to vector<1xf32>
      %60 = vector.shape_cast %59 : vector<1xf32> to vector<1x1xf32>
      %61 = tpu.iota {dimensions = array<i32: 1>} : vector<1x8x128xi32>
      %62 = vector.shape_cast %56 : vector<1x1xf32> to vector<1x1x1xf32>
      %63 = vector.shape_cast %62 : vector<1x1x1xf32> to vector<1x1x1xf32>
      %64 = vector.broadcast %63 : vector<1x1x1xf32> to vector<1x8x128xf32>
      %65 = vector.shape_cast %60 : vector<1x1xf32> to vector<1x1x1xf32>
      %66 = vector.shape_cast %65 : vector<1x1x1xf32> to vector<1x1x1xf32>
      %67 = vector.broadcast %66 : vector<1x1x1xf32> to vector<1x8x128xf32>
      %c0_i32_31 = arith.constant 0 : i32
      %68 = vector.broadcast %c0_i32_31 : i32 to vector<1x8x128xi32>
      %69 = arith.cmpi eq, %61, %68 : vector<1x8x128xi32>
      %c1_i32 = arith.constant 1 : i32
      %70 = vector.broadcast %c1_i32 : i32 to vector<1x8x128xi32>
      %71 = arith.cmpi eq, %61, %70 : vector<1x8x128xi32>
      %cst_32 = arith.constant 0.000000e+00 : f32
      %72 = vector.broadcast %cst_32 : f32 to vector<1x8x128xf32>
      %73 = arith.select %71, %67, %72 : vector<1x8x128xi1>, vector<1x8x128xf32>
      %74 = arith.select %69, %64, %73 : vector<1x8x128xi1>, vector<1x8x128xf32>
      %c0_33 = arith.constant 0 : index
      %c0_34 = arith.constant 0 : index
      %c0_35 = arith.constant 0 : index
      %75 = vector.load %arg4[%c0_33, %c0_34, %c0_35] : memref<1x8x128xf32, #tpu.memory_space<vmem>>, vector<1x8x128xf32>
      tpu.vector_store %arg4[%c0_33, %c0_34, %c0_35], %74 {strides = array<i32>} : memref<1x8x128xf32, #tpu.memory_space<vmem>>, vector<1x8x128xf32>,
    } else {
    }
    return
  }
  func.func @transform_0(%arg0: i32, %arg1: i32) -> (i32, i32) {
    %c0_i32 = arith.constant 0 : i32
    %c0_i32_0 = arith.constant 0 : i32
    return %arg0, %c0_i32 : i32, i32
  }
  func.func @transform_1(%arg0: i32, %arg1: i32) -> (i32, i32) {
    %c0_i32 = arith.constant 0 : i32
    return %arg0, %arg1 : i32, i32
  }
  func.func @transform_2(%arg0: i32, %arg1: i32) -> (i32, i32, i32) {
    %c0_i32 = arith.constant 0 : i32
    %c0_i32_0 = arith.constant 0 : i32
    %c0_i32_1 = arith.constant 0 : i32
    return %arg0, %c0_i32, %c0_i32_0 : i32, i32, i32
  }
}

</mosaic_0001>

<llo_original>
// kernel: tpu_custom_call.1
$region0: #{tpu_custom_call.1}
  #allocation0 [shape = 'u32[]', space=smem, size = 0x4, offset = 0x4, fixed_abs, tag = 'smem constant byte address 0x4 - core index']
  #allocation1 [shape = 'u32[144,128]{1,0:T(1,128)}', space=vmem, size = 0x12000, scoped, tag = 'internal scratch']
  #allocation2 [shape = 'f32[16,1]{1,0:T(8,128)}', space=vmem, size = 0x2000, scoped, tag = 'scratch operand']
  #allocation3 [shape = 'f32[16,1]{1,0:T(8,128)}', space=vmem, size = 0x2000, scoped, tag = 'scratch operand']
  #allocation4 [shape = 'f32[16,1]{1,0:T(8,128)}', space=vmem, size = 0x2000, scoped, tag = 'scratch operand']
  %s0 = inlined_call_operand.vmem [shape: s32[16,1], index: 0, kind: input, shape index: {}]
  %s1 = inlined_call_operand.hbm [shape: bf16[16,2048], index: 1, kind: input, shape index: {}]
  %s2 = inlined_call_operand.hbm [shape: f32[1,8,128], index: 2, kind: output, shape index: {}]
  %s3 = sld [smem:[#allocation0]]
  $region30: #{tpu_custom_call.1} parent=0
    _
  %s5 = ssub.s32 1, %s3
  %s6 = scalar_select 0, %s5, %s3
  $region1: #{tpu_custom_call.1} parent=0
    #allocation5 [shape = 'u8[65536]{0}', space=vmem, size = 0x10000, scoped, tag = 'input window, operand 1, single buffered']
    #allocation6 [shape = 's32[1]{0}', space=sflag, size = 0x4, scoped, tag = 'scoped memory for tpu_custom_call.1']
    #allocation7 [shape = 's32[1]{0}', space=sflag, size = 0x4, scoped, tag = 'scoped memory for tpu_custom_call.1']
    #allocation8 [shape = 'u8[4096]{0}', space=vmem, size = 0x1000, scoped, tag = 'output window, operand 0, single buffered']
    %7 = vsyncpa [#allocation6], 0
    %8 = vsyncpa [#allocation7], 0
    // Predicated region
    $region2: #{tpu_custom_call.1} parent=1 // pred_check
      _
    $region3: #{tpu_custom_call.1} parent=1 // pred_check_branch
      %10 = sbr.rel (0) target = $region5
    $region4: #{tpu_custom_call.1} parent=1 // pred_region
      _
    $region5: #{tpu_custom_call.1} parent=1 // pred_fallthru
      _
    // Predicated region
    $region6: #{tpu_custom_call.1} parent=1 // pred_check
      _
    $region7: #{tpu_custom_call.1} parent=1 // pred_check_branch
      %12 = sbr.rel (0) target = $region9
    $region8: #{tpu_custom_call.1} parent=1 // pred_region
      %s14 = ssub.s32 2048, 2048
      %15 = vsyncadd [#allocation6], %s14
      %s16 = sshll.u32 [#allocation5], 4
      %s17 = int_to_ptr.vmem [resolvable:$true] %s16
      %22 = dma.hbm_to_vmem [thread:$0]  %s1, 2048, %s17, [#allocation6], 1024, 1024, 64
    $region9: #{tpu_custom_call.1} parent=1 // pred_fallthru
      _
    // Predicated region
    $region10: #{tpu_custom_call.1} parent=1 // pred_check
      _
    $region11: #{tpu_custom_call.1} parent=1 // pred_check_branch
      %24 = sbr.rel (0) target = $region13
    $region12: #{tpu_custom_call.1} parent=1 // pred_region
      %25 = dma.done [#allocation6], 2048
    $region13: #{tpu_custom_call.1} parent=1 // pred_fallthru
      _
    %p26 = scmp.eq.s32.totalorder 0, 0
    // Predicated region
    $region14: #{tpu_custom_call.1} parent=1 // pred_check
      %p27 = pneg %p26
    $region15: #{tpu_custom_call.1} parent=1 // pred_check_branch
      %29 = sbr.rel (%p27) target = $region17
    $region16: #{tpu_custom_call.1} parent=1 // pred_region
      %vm30 = vcmask 7168
      %31 = vst.msk [vmem:[#allocation2] sm:$0xff] %vm30, -inf
      %32 = vst.msk [vmem:[#allocation2 + $0x8] sm:$0xff] %vm30, -inf
      %33 = vst.msk [vmem:[#allocation3] sm:$0xff] %vm30, 0.0
      %34 = vst.msk [vmem:[#allocation3 + $0x8] sm:$0xff] %vm30, 0.0
      %35 = vst.msk [vmem:[#allocation4] sm:$0xff] %vm30, 0.0
      %36 = vst.msk [vmem:[#allocation4 + $0x8] sm:$0xff] %vm30, 0.0
    $region17: #{tpu_custom_call.1} parent=1 // pred_fallthru
      _
    %v37 = vld [vmem:[%s0] sm:$0xff]
    %v38 = vld [vmem:[%s0 + $0x8] sm:$0xff]
    %s39 = smul.u32 0, 2048
    %v40 = vstv %s39
    %v41 = vsub.s32 %v37, %v40
    %v42 = vsub.s32 %v38, %v40
    %v43 = vld [vmem:[#allocation5] sm:$0xff]
    %v44 = vld [vmem:[#allocation5 + $0x8] sm:$0xff]
    %v45 = vld [vmem:[#allocation5 + $0x10] sm:$0xff]
    %v46 = vld [vmem:[#allocation5 + $0x18] sm:$0xff]
    %v47 = vld [vmem:[#allocation5 + $0x20] sm:$0xff]
    %v48 = vld [vmem:[#allocation5 + $0x28] sm:$0xff]
    %v49 = vld [vmem:[#allocation5 + $0x30] sm:$0xff]
    %v50 = vld [vmem:[#allocation5 + $0x38] sm:$0xff]
    %v51 = vld [vmem:[#allocation5 + $0x40] sm:$0xff]
    %v52 = vld [vmem:[#allocation5 + $0x48] sm:$0xff]
    %v53 = vld [vmem:[#allocation5 + $0x50] sm:$0xff]
    %v54 = vld [vmem:[#allocation5 + $0x58] sm:$0xff]
    %v55 = vld [vmem:[#allocation5 + $0x60] sm:$0xff]
    %v56 = vld [vmem:[#allocation5 + $0x68] sm:$0xff]
    %v57 = vld [vmem:[#allocation5 + $0x70] sm:$0xff]
    %v58 = vld [vmem:[#allocation5 + $0x78] sm:$0xff]
    %v59 = vunpack.c.l.bf16 %v43
    %v60 = vunpack.c.h.bf16 %v43
    %v61 = vunpack.c.l.bf16 %v44
    %v62 = vunpack.c.h.bf16 %v44
    %v63 = vunpack.c.l.bf16 %v45
    %v64 = vunpack.c.h.bf16 %v45
    %v65 = vunpack.c.l.bf16 %v46
    %v66 = vunpack.c.h.bf16 %v46
    %v67 = vunpack.c.l.bf16 %v47
    %v68 = vunpack.c.h.bf16 %v47
    %v69 = vunpack.c.l.bf16 %v48
    %v70 = vunpack.c.h.bf16 %v48
    %v71 = vunpack.c.l.bf16 %v49
    %v72 = vunpack.c.h.bf16 %v49
    %v73 = vunpack.c.l.bf16 %v50
    %v74 = vunpack.c.h.bf16 %v50
    %v75 = vunpack.c.l.bf16 %v51
    %v76 = vunpack.c.h.bf16 %v51
    %v77 = vunpack.c.l.bf16 %v52
    %v78 = vunpack.c.h.bf16 %v52
    %v79 = vunpack.c.l.bf16 %v53
    %v80 = vunpack.c.h.bf16 %v53
    %v81 = vunpack.c.l.bf16 %v54
    %v82 = vunpack.c.h.bf16 %v54
    %v83 = vunpack.c.l.bf16 %v55
    %v84 = vunpack.c.h.bf16 %v55
    %v85 = vunpack.c.l.bf16 %v56
    %v86 = vunpack.c.h.bf16 %v56
    %v87 = vunpack.c.l.bf16 %v57
    %v88 = vunpack.c.h.bf16 %v57
    %v89 = vunpack.c.l.bf16 %v58
    %v90 = vunpack.c.h.bf16 %v58
    %v91 = vlaneseq
    %v92 = vand.u32 %v91, 127
    %v93 = vadd.s32 %v92, 128
    %v94 = vadd.s32 %v92, 256
    %v95 = vadd.s32 %v92, 384
    %v96 = vadd.s32 %v92, 512
    %v97 = vadd.s32 %v92, 640
    %v98 = vadd.s32 %v92, 768
    %v99 = vadd.s32 %v92, 896
    %v100 = vadd.s32 %v92, 1024
    %v101 = vadd.s32 %v92, 1152
    %v102 = vadd.s32 %v92, 1280
    %v103 = vadd.s32 %v92, 1408
    %v104 = vadd.s32 %v92, 1536
    %v105 = vadd.s32 %v92, 1664
    %v106 = vadd.s32 %v92, 1792
    %v107 = vadd.s32 %v92, 1920
    %v108 = vld [vmem:[#allocation2] sm:$0xff]
    %v109 = vld [vmem:[#allocation2 + $0x8] sm:$0xff]
    %v110 = vmax.f32 %v59, %v61
    %v111 = vmax.f32 %v60, %v62
    %v112 = vmax.f32 %v110, %v63
    %v113 = vmax.f32 %v111, %v64
    %v114 = vmax.f32 %v112, %v65
    %v115 = vmax.f32 %v113, %v66
    %v116 = vmax.f32 %v114, %v67
    %v117 = vmax.f32 %v115, %v68
    %v118 = vmax.f32 %v116, %v69
    %v119 = vmax.f32 %v117, %v70
    %v120 = vmax.f32 %v118, %v71
    %v121 = vmax.f32 %v119, %v72
    %v122 = vmax.f32 %v120, %v73
    %v123 = vmax.f32 %v121, %v74
    %v124 = vmax.f32 %v122, %v123
    %125 = vmax.xlane.f32.xlu0 %v124
    %v126 = vpop.xlane.xlu0 %125
    %v127 = vmax.f32 %v75, %v77
    %v128 = vmax.f32 %v76, %v78
    %v129 = vmax.f32 %v127, %v79
    %v130 = vmax.f32 %v128, %v80
    %v131 = vmax.f32 %v129, %v81
    %v132 = vmax.f32 %v130, %v82
    %v133 = vmax.f32 %v131, %v83
    %v134 = vmax.f32 %v132, %v84
    %v135 = vmax.f32 %v133, %v85
    %v136 = vmax.f32 %v134, %v86
    %v137 = vmax.f32 %v135, %v87
    %v138 = vmax.f32 %v136, %v88
    %v139 = vmax.f32 %v137, %v89
    %v140 = vmax.f32 %v138, %v90
    %v141 = vmax.f32 %v139, %v140
    %142 = vmax.xlane.f32.xlu0 %v141
    %v143 = vpop.xlane.xlu0 %142
    %v144 = vmax.f32 %v108, %v126
    %v145 = vmax.f32 %v109, %v143
    %v146 = vsub.f32 %v108, %v144
    %v147 = vsub.f32 %v109, %v145
    %v148 = vmul.f32 %v146, 1.442695
    %v149 = vpow.pop %v148
    %v150 = vmul.f32 %v147, 1.442695
    %v151 = vpow.pop %v150
    %153 = vset.pattern.permute.xlu0 0
    %154 = vperm.xlu0 %153, %v144
    %v155 = vpop.permute.xlu0 %154
    %158 = vset.pattern.permute.xlu0 0
    %159 = vperm.xlu0 %158, %v145
    %v160 = vpop.permute.xlu0 %159
    %v162 = vsub.f32 %v59, %v155
    %v163 = vsub.f32 %v60, %v155
    %v164 = vsub.f32 %v61, %v155
    %v165 = vsub.f32 %v62, %v155
    %v166 = vsub.f32 %v63, %v155
    %v167 = vsub.f32 %v64, %v155
    %v168 = vsub.f32 %v65, %v155
    %v169 = vsub.f32 %v66, %v155
    %v170 = vsub.f32 %v67, %v155
    %v171 = vsub.f32 %v68, %v155
    %v172 = vsub.f32 %v69, %v155
    %v173 = vsub.f32 %v70, %v155
    %v174 = vsub.f32 %v71, %v155
    %v175 = vsub.f32 %v72, %v155
    %v176 = vsub.f32 %v73, %v155
    %v177 = vsub.f32 %v74, %v155
    %v178 = vsub.f32 %v75, %v160
    %v179 = vsub.f32 %v76, %v160
    %v180 = vsub.f32 %v77, %v160
    %v181 = vsub.f32 %v78, %v160
    %v182 = vsub.f32 %v79, %v160
    %v183 = vsub.f32 %v80, %v160
    %v184 = vsub.f32 %v81, %v160
    %v185 = vsub.f32 %v82, %v160
    %v186 = vsub.f32 %v83, %v160
    %v187 = vsub.f32 %v84, %v160
    %v188 = vsub.f32 %v85, %v160
    %v189 = vsub.f32 %v86, %v160
    %v190 = vsub.f32 %v87, %v160
    %v191 = vsub.f32 %v88, %v160
    %v192 = vsub.f32 %v89, %v160
    %v193 = vsub.f32 %v90, %v160
    %v194 = vmul.f32 %v162, 1.442695
    %v195 = vpow.pop %v194
    %v196 = vmul.f32 %v163, 1.442695
    %v197 = vpow.pop %v196
    %v198 = vmul.f32 %v164, 1.442695
    %v199 = vpow.pop %v198
    %v200 = vmul.f32 %v165, 1.442695
    %v201 = vpow.pop %v200
    %v202 = vmul.f32 %v166, 1.442695
    %v203 = vpow.pop %v202
    %v204 = vmul.f32 %v167, 1.442695
    %v205 = vpow.pop %v204
    %v206 = vmul.f32 %v168, 1.442695
    %v207 = vpow.pop %v206
    %v208 = vmul.f32 %v169, 1.442695
    %v209 = vpow.pop %v208
    %v210 = vmul.f32 %v170, 1.442695
    %v211 = vpow.pop %v210
    %v212 = vmul.f32 %v171, 1.442695
    %v213 = vpow.pop %v212
    %v214 = vmul.f32 %v172, 1.442695
    %v215 = vpow.pop %v214
    %v216 = vmul.f32 %v173, 1.442695
    %v217 = vpow.pop %v216
    %v218 = vmul.f32 %v174, 1.442695
    %v219 = vpow.pop %v218
    %v220 = vmul.f32 %v175, 1.442695
    %v221 = vpow.pop %v220
    %v222 = vmul.f32 %v176, 1.442695
    %v223 = vpow.pop %v222
    %v224 = vmul.f32 %v177, 1.442695
    %v225 = vpow.pop %v224
    %v226 = vmul.f32 %v178, 1.442695
    %v227 = vpow.pop %v226
    %v228 = vmul.f32 %v179, 1.442695
    %v229 = vpow.pop %v228
    %v230 = vmul.f32 %v180, 1.442695
    %v231 = vpow.pop %v230
    %v232 = vmul.f32 %v181, 1.442695
    %v233 = vpow.pop %v232
    %v234 = vmul.f32 %v182, 1.442695
    %v235 = vpow.pop %v234
    %v236 = vmul.f32 %v183, 1.442695
    %v237 = vpow.pop %v236
    %v238 = vmul.f32 %v184, 1.442695
    %v239 = vpow.pop %v238
    %v240 = vmul.f32 %v185, 1.442695
    %v241 = vpow.pop %v240
    %v242 = vmul.f32 %v186, 1.442695
    %v243 = vpow.pop %v242
    %v244 = vmul.f32 %v187, 1.442695
    %v245 = vpow.pop %v244
    %v246 = vmul.f32 %v188, 1.442695
    %v247 = vpow.pop %v246
    %v248 = vmul.f32 %v189, 1.442695
    %v249 = vpow.pop %v248
    %v250 = vmul.f32 %v190, 1.442695
    %v251 = vpow.pop %v250
    %v252 = vmul.f32 %v191, 1.442695
    %v253 = vpow.pop %v252
    %v254 = vmul.f32 %v192, 1.442695
    %v255 = vpow.pop %v254
    %v256 = vmul.f32 %v193, 1.442695
    %v257 = vpow.pop %v256
    %v258 = vld [vmem:[#allocation3] sm:$0xff]
    %v259 = vld [vmem:[#allocation3 + $0x8] sm:$0xff]
    %v260 = vmul.f32 %v149, %v258
    %v261 = vmul.f32 %v151, %v259
    %v262 = vadd.f32 %v195, %v197
    %v263 = vadd.f32 %v262, %v199
    %v264 = vadd.f32 %v263, %v201
    %v265 = vadd.f32 %v264, %v203
    %v266 = vadd.f32 %v265, %v205
    %v267 = vadd.f32 %v266, %v207
    %v268 = vadd.f32 %v267, %v209
    %v269 = vadd.f32 %v268, %v211
    %v270 = vadd.f32 %v269, %v213
    %v271 = vadd.f32 %v270, %v215
    %v272 = vadd.f32 %v271, %v217
    %v273 = vadd.f32 %v272, %v219
    %v274 = vadd.f32 %v273, %v221
    %v275 = vadd.f32 %v274, %v223
    %v276 = vadd.f32 %v275, %v225
    %277 = vadd.xlane.f32.xlu0 %v276
    %v278 = vpop.xlane.xlu0 %277
    %v279 = vadd.f32 %v227, %v229
    %v280 = vadd.f32 %v279, %v231
    %v281 = vadd.f32 %v280, %v233
    %v282 = vadd.f32 %v281, %v235
    %v283 = vadd.f32 %v282, %v237
    %v284 = vadd.f32 %v283, %v239
    %v285 = vadd.f32 %v284, %v241
    %v286 = vadd.f32 %v285, %v243
    %v287 = vadd.f32 %v286, %v245
    %v288 = vadd.f32 %v287, %v247
    %v289 = vadd.f32 %v288, %v249
    %v290 = vadd.f32 %v289, %v251
    %v291 = vadd.f32 %v290, %v253
    %v292 = vadd.f32 %v291, %v255
    %v293 = vadd.f32 %v292, %v257
    %294 = vadd.xlane.f32.xlu0 %v293
    %v295 = vpop.xlane.xlu0 %294
    %v296 = vadd.f32 %v260, %v278
    %v297 = vadd.f32 %v261, %v295
    %vm298 = vcmask 7168
    %299 = vst.msk [vmem:[#allocation3] sm:$0xff] %vm298, %v296
    %300 = vst.msk [vmem:[#allocation3 + $0x8] sm:$0xff] %vm298, %v297
    %v301 = vld [vmem:[#allocation4] sm:$0xff]
    %v302 = vld [vmem:[#allocation4 + $0x8] sm:$0xff]
    %303 = vset.pattern.permute.xlu0 0
    %304 = vperm.xlu0 %303, %v41
    %v305 = vpop.permute.xlu0 %304
    %306 = vset.pattern.permute.xlu0 0
    %307 = vperm.xlu0 %306, %v42
    %v308 = vpop.permute.xlu0 %307
    %vm309 = vcmp.eq.s32.totalorder %v92, %v305
    %vm310 = vcmp.eq.s32.totalorder %v93, %v305
    %vm311 = vcmp.eq.s32.totalorder %v94, %v305
    %vm312 = vcmp.eq.s32.totalorder %v95, %v305
    %vm313 = vcmp.eq.s32.totalorder %v96, %v305
    %vm314 = vcmp.eq.s32.totalorder %v97, %v305
    %vm315 = vcmp.eq.s32.totalorder %v98, %v305
    %vm316 = vcmp.eq.s32.totalorder %v99, %v305
    %vm317 = vcmp.eq.s32.totalorder %v100, %v305
    %vm318 = vcmp.eq.s32.totalorder %v101, %v305
    %vm319 = vcmp.eq.s32.totalorder %v102, %v305
    %vm320 = vcmp.eq.s32.totalorder %v103, %v305
    %vm321 = vcmp.eq.s32.totalorder %v104, %v305
    %vm322 = vcmp.eq.s32.totalorder %v105, %v305
    %vm323 = vcmp.eq.s32.totalorder %v106, %v305
    %vm324 = vcmp.eq.s32.totalorder %v107, %v305
    %vm325 = vcmp.eq.s32.totalorder %v92, %v308
    %vm326 = vcmp.eq.s32.totalorder %v93, %v308
    %vm327 = vcmp.eq.s32.totalorder %v94, %v308
    %vm328 = vcmp.eq.s32.totalorder %v95, %v308
    %vm329 = vcmp.eq.s32.totalorder %v96, %v308
    %vm330 = vcmp.eq.s32.totalorder %v97, %v308
    %vm331 = vcmp.eq.s32.totalorder %v98, %v308
    %vm332 = vcmp.eq.s32.totalorder %v99, %v308
    %vm333 = vcmp.eq.s32.totalorder %v100, %v308
    %vm334 = vcmp.eq.s32.totalorder %v101, %v308
    %vm335 = vcmp.eq.s32.totalorder %v102, %v308
    %vm336 = vcmp.eq.s32.totalorder %v103, %v308
    %vm337 = vcmp.eq.s32.totalorder %v104, %v308
    %vm338 = vcmp.eq.s32.totalorder %v105, %v308
    %vm339 = vcmp.eq.s32.totalorder %v106, %v308
    %vm340 = vcmp.eq.s32.totalorder %v107, %v308
    %v341 = vsel %vm309, %v59, 0.0
    %v342 = vsel %vm310, %v60, 0.0
    %v343 = vsel %vm311, %v61, 0.0
    %v344 = vsel %vm312, %v62, 0.0
    %v345 = vsel %vm313, %v63, 0.0
    %v346 = vsel %vm314, %v64, 0.0
    %v347 = vsel %vm315, %v65, 0.0
    %v348 = vsel %vm316, %v66, 0.0
    %v349 = vsel %vm317, %v67, 0.0
    %v350 = vsel %vm318, %v68, 0.0
    %v351 = vsel %vm319, %v69, 0.0
    %v352 = vsel %vm320, %v70, 0.0
    %v353 = vsel %vm321, %v71, 0.0
    %v354 = vsel %vm322, %v72, 0.0
    %v355 = vsel %vm323, %v73, 0.0
    %v356 = vsel %vm324, %v74, 0.0
    %v357 = vsel %vm325, %v75, 0.0
    %v358 = vsel %vm326, %v76, 0.0
    %v359 = vsel %vm327, %v77, 0.0
    %v360 = vsel %vm328, %v78, 0.0
    %v361 = vsel %vm329, %v79, 0.0
    %v362 = vsel %vm330, %v80, 0.0
    %v363 = vsel %vm331, %v81, 0.0
    %v364 = vsel %vm332, %v82, 0.0
    %v365 = vsel %vm333, %v83, 0.0
    %v366 = vsel %vm334, %v84, 0.0
    %v367 = vsel %vm335, %v85, 0.0
    %v368 = vsel %vm336, %v86, 0.0
    %v369 = vsel %vm337, %v87, 0.0
    %v370 = vsel %vm338, %v88, 0.0
    %v371 = vsel %vm339, %v89, 0.0
    %v372 = vsel %vm340, %v90, 0.0
    %v373 = vadd.f32 %v341, %v342
    %v374 = vadd.f32 %v373, %v343
    %v375 = vadd.f32 %v374, %v344
    %v376 = vadd.f32 %v375, %v345
    %v377 = vadd.f32 %v376, %v346
    %v378 = vadd.f32 %v377, %v347
    %v379 = vadd.f32 %v378, %v348
    %v380 = vadd.f32 %v379, %v349
    %v381 = vadd.f32 %v380, %v350
    %v382 = vadd.f32 %v381, %v351
    %v383 = vadd.f32 %v382, %v352
    %v384 = vadd.f32 %v383, %v353
    %v385 = vadd.f32 %v384, %v354
    %v386 = vadd.f32 %v385, %v355
    %v387 = vadd.f32 %v386, %v356
    %388 = vadd.xlane.f32.xlu0 %v387
    %v389 = vpop.xlane.xlu0 %388
    %v390 = vadd.f32 %v357, %v358
    %v391 = vadd.f32 %v390, %v359
    %v392 = vadd.f32 %v391, %v360
    %v393 = vadd.f32 %v392, %v361
    %v394 = vadd.f32 %v393, %v362
    %v395 = vadd.f32 %v394, %v363
    %v396 = vadd.f32 %v395, %v364
    %v397 = vadd.f32 %v396, %v365
    %v398 = vadd.f32 %v397, %v366
    %v399 = vadd.f32 %v398, %v367
    %v400 = vadd.f32 %v399, %v368
    %v401 = vadd.f32 %v400, %v369
    %v402 = vadd.f32 %v401, %v370
    %v403 = vadd.f32 %v402, %v371
    %v404 = vadd.f32 %v403, %v372
    %405 = vadd.xlane.f32.xlu0 %v404
    %v406 = vpop.xlane.xlu0 %405
    %v407 = vadd.f32 %v301, %v389
    %v408 = vadd.f32 %v302, %v406
    %409 = vst.msk [vmem:[#allocation4] sm:$0xff] %vm298, %v407
    %410 = vst.msk [vmem:[#allocation4 + $0x8] sm:$0xff] %vm298, %v408
    %411 = vst.msk [vmem:[#allocation2] sm:$0xff] %vm298, %v144
    %412 = vst.msk [vmem:[#allocation2 + $0x8] sm:$0xff] %vm298, %v145
    // Predicated region
    $region18: #{tpu_custom_call.1} parent=1 // pred_check
      %p413 = pneg %p26
    $region19: #{tpu_custom_call.1} parent=1 // pred_check_branch
      %415 = sbr.rel (%p413) target = $region21
    $region20: #{tpu_custom_call.1} parent=1 // pred_region
      %v416 = vld [vmem:[#allocation2] sm:$0xff]
      %v417 = vld [vmem:[#allocation2 + $0x8] sm:$0xff]
      %v418 = vld [vmem:[#allocation3] sm:$0xff]
      %v419 = vld [vmem:[#allocation3 + $0x8] sm:$0xff]
      %v420 = vlog2.pop %v418
      %v421 = vmul.f32 %v420, 0.6931472
      %v422 = vlog2.pop %v419
      %v423 = vmul.f32 %v422, 0.6931472
      %v424 = vadd.f32 %v416, %v421
      %v425 = vadd.f32 %v417, %v423
      %s426 = smul.u32 0, 16
      %v427 = vlaneseq
      %v428 = vshrl.u32 %v427, 7
      %v429 = vadd.s32 %v428, 8
      %v430 = vstv %s426
      %v431 = vadd.s32 %v430, %v428
      %v432 = vadd.s32 %v430, %v429
      %vm433 = vcmp.ne.s32.totalorder %v37, 4294967196
      %vm434 = vcmp.ne.s32.totalorder %v38, 4294967196
      %vm435 = vcmp.lt.s32.totalorder %v431, 16
      %vm436 = vcmp.lt.s32.totalorder %v432, 16
      %vm437 = vmand %vm433, %vm435
      %vm438 = vmand %vm434, %vm436
      %v439 = vld [vmem:[#allocation4] sm:$0xff]
      %v440 = vld [vmem:[#allocation4 + $0x8] sm:$0xff]
      %v441 = vsub.f32 %v424, %v439
      %v442 = vsub.f32 %v425, %v440
      %v443 = vsel %vm437, %v441, 0.0
      %v444 = vsel %vm438, %v442, 0.0
      %v445 = vsel %vm298, %v443, 0.0
      %v446 = vsel %vm298, %v444, 0.0
      %v447 = vadd.f32 %v445, %v446
      %v448 = vrot.slane %v447, 4
      %v449 = vadd.f32 %v447, %v448
      %v450 = vrot.slane %v449, 2
      %v451 = vadd.f32 %v449, %v450
      %v452 = vrot.slane %v451, 1
      %v453 = vadd.f32 %v451, %v452
      %v454 = vsel %vm437, 1, 0
      %v455 = vsel %vm438, 1, 0
      %v456 = vcvt.s32.f32 %v454
      %v457 = vcvt.s32.f32 %v455
      %v458 = vsel %vm298, %v456, 0.0
      %v459 = vsel %vm298, %v457, 0.0
      %v460 = vadd.f32 %v458, %v459
      %v461 = vrot.slane %v460, 4
      %v462 = vadd.f32 %v460, %v461
      %v463 = vrot.slane %v462, 2
      %v464 = vadd.f32 %v462, %v463
      %v465 = vrot.slane %v464, 1
      %v466 = vadd.f32 %v464, %v465
      %468 = vset.pattern.permute.xlu0 0
      %469 = vperm.xlu0 %468, %v453
      %v470 = vpop.permute.xlu0 %469
      %473 = vset.pattern.permute.xlu0 0
      %474 = vperm.xlu0 %473, %v466
      %v475 = vpop.permute.xlu0 %474
      %vm477 = vcmp.eq.s32.totalorder %v428, 0
      %vm478 = vcmp.eq.s32.totalorder %v428, 1
      %v479 = vsel %vm478, %v475, 0.0
      %v480 = vsel %vm477, %v470, %v479
      %481 = vst [vmem:[#allocation8] sm:$0xff] %v480
    $region21: #{tpu_custom_call.1} parent=1 // pred_fallthru
      _
    // Predicated region
    $region22: #{tpu_custom_call.1} parent=1 // pred_check
      _
    $region23: #{tpu_custom_call.1} parent=1 // pred_check_branch
      %483 = sbr.rel (0) target = $region25
    $region24: #{tpu_custom_call.1} parent=1 // pred_region
      %s485 = ssub.s32 128, 128
      %486 = vsyncadd [#allocation7], %s485
      %s488 = sshll.u32 [#allocation8], 4
      %s489 = int_to_ptr.vmem [resolvable:$true] %s488
      %491 = dma.vmem_to_hbm [thread:$0]  %s489, 128, %s2, [#allocation7]
    $region25: #{tpu_custom_call.1} parent=1 // pred_fallthru
      _
    // Predicated region
    $region26: #{tpu_custom_call.1} parent=1 // pred_check
      _
    $region27: #{tpu_custom_call.1} parent=1 // pred_check_branch
      %493 = sbr.rel (0) target = $region29
    $region28: #{tpu_custom_call.1} parent=1 // pred_region
      %494 = dma.done [#allocation7], 128
    $region29: #{tpu_custom_call.1} parent=1 // pred_fallthru
      _
    %495 = vsyncpa [#allocation6], 1
    %496 = vsyncpa [#allocation7], 1

</llo_original>
